<compile_context>
chip_gen: v6e
topology: v6e:2x2x1
jax: 0.10.0
libtpu: 0.0.40
codegen_flags: <defaults>
</compile_context>

<pallas_src>
import jax
import jax.numpy as jnp
from jax.experimental import pallas as pl
from jax.experimental.pallas import tpu as pltpu


_LANE = 128
_TILE_BUDGET_BYTES = 2 * 1024 * 1024      # per-tensor, per-block VMEM footprint
_VMEM_LIMIT_BYTES = 32 * 1024 * 1024      # within scoped/physical VMEM on v5e/v6e/v7x


def _sublane_granularity(dtype):
    """Packed sublane granularity: 8 rows for 32-bit, 16 for 16-bit, 32 for 8-bit."""
    itemsize = jnp.dtype(dtype).itemsize
    return max(8, 32 // max(1, itemsize))


def _lane_dense_2d(x):
    """Flatten x to a lane-dense (rows, 128*k) 2-D view.

    A copy is order-preserving, so a flat row-major reshape is free and valid.
    Falls back to (-1, last_dim) (block last dim == full array dim is always
    legal) when the element count is not a multiple of 128.
    """
    n = x.size
    for w in (2048, 1024, 512, 256, 128):
        if n % w == 0 and n >= w:
            return x.reshape(n // w, w), x.shape
    d = x.shape[-1] if x.ndim >= 1 else 1
    return x.reshape(-1, d), x.shape


def _choose_tm(m, w, dtype, budget_bytes):
    """Pick a row-tile height for an (m, w) lane-dense slab."""
    gran = _sublane_granularity(dtype)
    if m <= gran:
        return max(1, m)                      # full-extent first dim (always legal)
    row_bytes = w * jnp.dtype(dtype).itemsize
    budget_rows = max(gran, budget_bytes // max(1, row_bytes))
    tm = min(m, budget_rows)
    # Keep >= 2 grid steps when there is enough work so both v7x TCs stream.
    if tm >= m and m >= 2 * gran:
        tm = (m + 1) // 2
    tm = max(gran, (tm // gran) * gran)
    return tm


def _copy2_kernel(s_ref, t_ref, so_ref, to_ref):
    # Pure tile copies: one VMEM block in -> same block out, for both tensors.
    so_ref[...] = s_ref[...]
    to_ref[...] = t_ref[...]


def _fused_identity_copy(student, teacher, *, tile_budget_bytes=_TILE_BUDGET_BYTES):
    """Single pallas_call that copies both tensors through VMEM unchanged."""
    s2d, s_shape = _lane_dense_2d(student)
    t2d, t_shape = _lane_dense_2d(teacher)
    (ms, ws), (mt, wt) = s2d.shape, t2d.shape

    tms = _choose_tm(ms, ws, s2d.dtype, tile_budget_bytes)
    tmt = _choose_tm(mt, wt, t2d.dtype, tile_budget_bytes)
    gs = pl.cdiv(ms, tms)
    gt = pl.cdiv(mt, tmt)
    grid_n = max(gs, gt)

    def row_map(num_blocks):
        # The longer tensor drives the grid; clamp the shorter one's block
        # index (idempotent identity writes + no re-DMA on repeated index).
        if num_blocks >= grid_n:
            return lambda i: (i, 0)
        last = num_blocks - 1
        return lambda i: (jnp.minimum(i, last), 0)

    total_bytes = (student.size * student.dtype.itemsize
                   + teacher.size * teacher.dtype.itemsize)

    out_s, out_t = pl.pallas_call(
        _copy2_kernel,
        out_shape=(jax.ShapeDtypeStruct(s2d.shape, s2d.dtype),
                   jax.ShapeDtypeStruct(t2d.shape, t2d.dtype)),
        grid_spec=pltpu.PrefetchScalarGridSpec(
            num_scalar_prefetch=0,
            grid=(grid_n,),
            in_specs=[pl.BlockSpec((tms, ws), row_map(gs)),
                      pl.BlockSpec((tmt, wt), row_map(gt))],
            out_specs=[pl.BlockSpec((tms, ws), row_map(gs)),
                       pl.BlockSpec((tmt, wt), row_map(gt))],
        ),
        input_output_aliases={0: 0, 1: 1},
        compiler_params=pltpu.CompilerParams(
            dimension_semantics=("parallel",),
            vmem_limit_bytes=_VMEM_LIMIT_BYTES),
        cost_estimate=pl.CostEstimate(
            flops=0, transcendentals=0, bytes_accessed=2 * total_bytes),
    )(s2d, t2d)

    return out_s.reshape(s_shape), out_t.reshape(t_shape)


def identity_projector_forward(student_features, teacher_features):
    """IdentityProjector.forward — pure passthrough (the optimal implementation)."""
    return student_features, teacher_features


def identity_projector_forward_pallas(student_features, teacher_features):
    """Same semantics, routed through one fused Pallas identity-copy kernel."""
    return _fused_identity_copy(student_features, teacher_features)


if __name__ == "__main__":
    key = jax.random.PRNGKey(0)
    ks, kt, kr, kb = jax.random.split(key, 4)

    batch, seq = 2, 8
    student_dim = 256
    teacher_dim = 384

    student = jax.random.normal(ks, (batch, seq, student_dim), jnp.float32)
    teacher = jax.random.normal(kt, (batch, seq, teacher_dim), jnp.float32)

    # Zero-cost spec path.
    s_pass, t_pass = identity_projector_forward(student, teacher)
    assert s_pass is student and t_pass is teacher

    # Pallas kernelized path (fused single launch, aliased outputs).
    s_out, t_out = identity_projector_forward_pallas(student, teacher)
    jax.block_until_ready(s_out)
    jax.block_until_ready(t_out)
    assert s_out.shape == student.shape and s_out.dtype == student.dtype
    assert t_out.shape == teacher.shape and t_out.dtype == teacher.dtype
    assert bool((s_out == student).all())
    assert bool((t_out == teacher).all())

    # Ragged row count (exercises masked tail + clamped index map for the
    # shorter tensor in the fused grid).
    ragged = jax.random.normal(kr, (3, 5, 256), jnp.float32)
    r_out, t_out2 = identity_projector_forward_pallas(ragged, teacher)
    jax.block_until_ready(r_out)
    assert bool((r_out == ragged).all())
    assert bool((t_out2 == teacher).all())

    # Sub-32-bit dtype (exercises packed sublane granularity handling).
    s_bf16 = jax.random.normal(kb, (4, 16, 128), jnp.float32).astype(jnp.bfloat16)
    sb_out, _ = identity_projector_forward_pallas(s_bf16, teacher)
    jax.block_until_ready(sb_out)
    assert sb_out.dtype == jnp.bfloat16
    assert bool((sb_out == s_bf16).all())

    print("KERNEL_OK")
</pallas_src>

<mosaic_0001>
module attributes {stable_mosaic.version = 11 : i64} {
  func.func @_copy2_kernel(%arg0: i32, %arg1: memref<2x2048xf32, #tpu.memory_space<vmem>>, %arg2: memref<3x2048xf32, #tpu.memory_space<vmem>>, %arg3: memref<2x2048xf32, #tpu.memory_space<vmem>>, %arg4: memref<3x2048xf32, #tpu.memory_space<vmem>>) attributes {dimension_semantics = [#tpu.dimension_semantics<parallel>], iteration_bounds = array<i64: 1>, scalar_prefetch = 0 : i64, scratch_operands = 0 : i64, tpu.core_type = #tpu.core_type<tc>, window_params = [{transform_indices = @transform_0, window_bounds = array<i64: 2, 2048>}, {transform_indices = @transform_1, window_bounds = array<i64: 3, 2048>}, {transform_indices = @transform_2, window_bounds = array<i64: 2, 2048>}, {transform_indices = @transform_3, window_bounds = array<i64: 3, 2048>}]} {
    %c0 = arith.constant 0 : index
    %c0_0 = arith.constant 0 : index
    %0 = vector.load %arg1[%c0, %c0_0] : memref<2x2048xf32, #tpu.memory_space<vmem>>, vector<2x2048xf32>
    %c0_1 = arith.constant 0 : index
    %c0_2 = arith.constant 0 : index
    %1 = vector.load %arg3[%c0_1, %c0_2] : memref<2x2048xf32, #tpu.memory_space<vmem>>, vector<2x2048xf32>
    tpu.vector_store %arg3[%c0_1, %c0_2], %0 {strides = array<i32>} : memref<2x2048xf32, #tpu.memory_space<vmem>>, vector<2x2048xf32>,
    %c0_3 = arith.constant 0 : index
    %c0_4 = arith.constant 0 : index
    %2 = vector.load %arg2[%c0_3, %c0_4] : memref<3x2048xf32, #tpu.memory_space<vmem>>, vector<3x2048xf32>
    %c0_5 = arith.constant 0 : index
    %c0_6 = arith.constant 0 : index
    %3 = vector.load %arg4[%c0_5, %c0_6] : memref<3x2048xf32, #tpu.memory_space<vmem>>, vector<3x2048xf32>
    tpu.vector_store %arg4[%c0_5, %c0_6], %2 {strides = array<i32>} : memref<3x2048xf32, #tpu.memory_space<vmem>>, vector<3x2048xf32>,
    return
  }
  func.func @transform_0(%arg0: i32) -> (i32, i32) {
    %c0_i32 = arith.constant 0 : i32
    %c0_i32_0 = arith.constant 0 : i32
    return %arg0, %c0_i32 : i32, i32
  }
  func.func @transform_1(%arg0: i32) -> (i32, i32) {
    %c0_i32 = arith.constant 0 : i32
    %c0_i32_0 = arith.constant 0 : i32
    return %arg0, %c0_i32 : i32, i32
  }
  func.func @transform_2(%arg0: i32) -> (i32, i32) {
    %c0_i32 = arith.constant 0 : i32
    %c0_i32_0 = arith.constant 0 : i32
    return %arg0, %c0_i32 : i32, i32
  }
  func.func @transform_3(%arg0: i32) -> (i32, i32) {
    %c0_i32 = arith.constant 0 : i32
    %c0_i32_0 = arith.constant 0 : i32
    return %arg0, %c0_i32 : i32, i32
  }
}

</mosaic_0001>

<llo_original>
// kernel: tpu_custom_call.1
$region0: #{tpu_custom_call.1}
  #allocation0 [shape = 'u32[]', space=smem, size = 0x4, offset = 0x4, fixed_abs, tag = 'smem constant byte address 0x4 - core index']
  #allocation1 [shape = 'u32[144,128]{1,0:T(1,128)}', space=vmem, size = 0x12000, scoped, tag = 'internal scratch']
  %s0 = inlined_call_operand.hbm [shape: f32[2,2048], index: 0, kind: input, shape index: {}, may-alias: {0,2}]
  %s1 = inlined_call_operand.hbm [shape: f32[3,2048], index: 1, kind: input, shape index: {}, may-alias: {1,3}]
  %s2 = inlined_call_operand.hbm [shape: f32[2,2048], index: 2, kind: output, shape index: {0}, may-alias: {0,2}]
  %s3 = inlined_call_operand.hbm [shape: f32[3,2048], index: 3, kind: output, shape index: {1}, may-alias: {1,3}]
  %4 = xla_tuple %s2, %s3
  %s5 = sld [smem:[#allocation0]]
  $region34: #{tpu_custom_call.1} parent=0
    _
  %s7 = ssub.s32 1, %s5
  %s8 = scalar_select 0, %s7, %s5
  $region1: #{tpu_custom_call.1} parent=0
    #allocation2 [shape = 'u8[16384]{0}', space=vmem, size = 0x4000, scoped, tag = 'input window, operand 0, single buffered']
    #allocation3 [shape = 's32[1]{0}', space=sflag, size = 0x4, scoped, tag = 'scoped memory for tpu_custom_call.1']
    #allocation4 [shape = 's32[1]{0}', space=sflag, size = 0x4, scoped, tag = 'scoped memory for tpu_custom_call.1']
    #allocation5 [shape = 'u8[32768]{0}', space=vmem, size = 0x8000, scoped, tag = 'input window, operand 1, single buffered']
    #allocation6 [shape = 's32[1]{0}', space=sflag, size = 0x4, scoped, tag = 'scoped memory for tpu_custom_call.1']
    #allocation7 [shape = 'u8[16384]{0}', space=vmem, size = 0x4000, scoped, tag = 'output window, operand 0, single buffered']
    #allocation8 [shape = 'u8[32768]{0}', space=vmem, size = 0x8000, scoped, tag = 'output window, operand 1, single buffered']
    #allocation9 [shape = 's32[1]{0}', space=sflag, size = 0x4, scoped, tag = 'scoped memory for tpu_custom_call.1']
    %9 = vsyncpa [#allocation3], 0
    %10 = vsyncpa [#allocation6], 0
    %11 = vsyncpa [#allocation4], 0
    %12 = vsyncpa [#allocation9], 0
    // Predicated region
    $region2: #{tpu_custom_call.1} parent=1 // pred_check
      _
    $region3: #{tpu_custom_call.1} parent=1 // pred_check_branch
      %14 = sbr.rel (0) target = $region5
    $region4: #{tpu_custom_call.1} parent=1 // pred_region
      %s16 = ssub.s32 512, 512
      %17 = vsyncadd [#allocation3], %s16
      %s19 = sshll.u32 [#allocation2], 4
      %s20 = int_to_ptr.vmem [resolvable:$true] %s19
      %22 = dma.hbm_to_vmem [thread:$0]  %s0, 512, %s20, [#allocation3]
    $region5: #{tpu_custom_call.1} parent=1 // pred_fallthru
      _
    // Predicated region
    $region6: #{tpu_custom_call.1} parent=1 // pred_check
      _
    $region7: #{tpu_custom_call.1} parent=1 // pred_check_branch
      %24 = sbr.rel (0) target = $region9
    $region8: #{tpu_custom_call.1} parent=1 // pred_region
      %s26 = ssub.s32 1024, 1024
      %27 = vsyncadd [#allocation6], %s26
      %s29 = sshll.u32 [#allocation5], 4
      %s30 = int_to_ptr.vmem [resolvable:$true] %s29
      %32 = dma.hbm_to_vmem [thread:$0]  %s1, 1024, %s30, [#allocation6]
    $region9: #{tpu_custom_call.1} parent=1 // pred_fallthru
      _
    // Predicated region
    $region10: #{tpu_custom_call.1} parent=1 // pred_check
      _
    $region11: #{tpu_custom_call.1} parent=1 // pred_check_branch
      %34 = sbr.rel (0) target = $region13
    $region12: #{tpu_custom_call.1} parent=1 // pred_region
      %35 = dma.done [#allocation3], 512
    $region13: #{tpu_custom_call.1} parent=1 // pred_fallthru
      _
    // Predicated region
    $region14: #{tpu_custom_call.1} parent=1 // pred_check
      _
    $region15: #{tpu_custom_call.1} parent=1 // pred_check_branch
      %37 = sbr.rel (0) target = $region17
    $region16: #{tpu_custom_call.1} parent=1 // pred_region
      %38 = dma.done [#allocation6], 1024
    $region17: #{tpu_custom_call.1} parent=1 // pred_fallthru
      _
    %v39 = vld [vmem:[#allocation2] sm:$0xff]
    %v40 = vld [vmem:[#allocation2 + $0x8] sm:$0xff]
    %v41 = vld [vmem:[#allocation2 + $0x10] sm:$0xff]
    %v42 = vld [vmem:[#allocation2 + $0x18] sm:$0xff]
    %43 = vst [vmem:[#allocation7] sm:$0xff] %v39
    %44 = vst [vmem:[#allocation7 + $0x8] sm:$0xff] %v40
    %45 = vst [vmem:[#allocation7 + $0x10] sm:$0xff] %v41
    %46 = vst [vmem:[#allocation7 + $0x18] sm:$0xff] %v42
    %v47 = vld [vmem:[#allocation5] sm:$0x77]
    %v48 = vld [vmem:[#allocation5 + $0x8] sm:$0x77]
    %v49 = vld [vmem:[#allocation5 + $0x10] sm:$0x77]
    %v50 = vld [vmem:[#allocation5 + $0x18] sm:$0x77]
    %v51 = vld [vmem:[#allocation5 + $0x20] sm:$0x77]
    %v52 = vld [vmem:[#allocation5 + $0x28] sm:$0x77]
    %v53 = vld [vmem:[#allocation5 + $0x30] sm:$0x77]
    %v54 = vld [vmem:[#allocation5 + $0x38] sm:$0x77]
    %55 = vst [vmem:[#allocation8] sm:$0x77] %v47
    %56 = vst [vmem:[#allocation8 + $0x8] sm:$0x77] %v48
    %57 = vst [vmem:[#allocation8 + $0x10] sm:$0x77] %v49
    %58 = vst [vmem:[#allocation8 + $0x18] sm:$0x77] %v50
    %59 = vst [vmem:[#allocation8 + $0x20] sm:$0x77] %v51
    %60 = vst [vmem:[#allocation8 + $0x28] sm:$0x77] %v52
    %61 = vst [vmem:[#allocation8 + $0x30] sm:$0x77] %v53
    %62 = vst [vmem:[#allocation8 + $0x38] sm:$0x77] %v54
    // Predicated region
    $region18: #{tpu_custom_call.1} parent=1 // pred_check
      _
    $region19: #{tpu_custom_call.1} parent=1 // pred_check_branch
      %64 = sbr.rel (0) target = $region21
    $region20: #{tpu_custom_call.1} parent=1 // pred_region
      %s66 = ssub.s32 512, 512
      %67 = vsyncadd [#allocation4], %s66
      %s69 = sshll.u32 [#allocation7], 4
      %s70 = int_to_ptr.vmem [resolvable:$true] %s69
      %72 = dma.vmem_to_hbm [thread:$0]  %s70, 512, %s2, [#allocation4]
    $region21: #{tpu_custom_call.1} parent=1 // pred_fallthru
      _
    // Predicated region
    $region22: #{tpu_custom_call.1} parent=1 // pred_check
      _
    $region23: #{tpu_custom_call.1} parent=1 // pred_check_branch
      %74 = sbr.rel (0) target = $region25
    $region24: #{tpu_custom_call.1} parent=1 // pred_region
      %s76 = ssub.s32 1024, 1024
      %77 = vsyncadd [#allocation9], %s76
      %s79 = sshll.u32 [#allocation8], 4
      %s80 = int_to_ptr.vmem [resolvable:$true] %s79
      %82 = dma.vmem_to_hbm [thread:$0]  %s80, 1024, %s3, [#allocation9]
    $region25: #{tpu_custom_call.1} parent=1 // pred_fallthru
      _
    // Predicated region
    $region26: #{tpu_custom_call.1} parent=1 // pred_check
      _
    $region27: #{tpu_custom_call.1} parent=1 // pred_check_branch
      %84 = sbr.rel (0) target = $region29
    $region28: #{tpu_custom_call.1} parent=1 // pred_region
      %85 = dma.done [#allocation4], 512
    $region29: #{tpu_custom_call.1} parent=1 // pred_fallthru
      _
    // Predicated region
    $region30: #{tpu_custom_call.1} parent=1 // pred_check
      _
    $region31: #{tpu_custom_call.1} parent=1 // pred_check_branch
      %87 = sbr.rel (0) target = $region33
    $region32: #{tpu_custom_call.1} parent=1 // pred_region
      %88 = dma.done [#allocation9], 1024
    $region33: #{tpu_custom_call.1} parent=1 // pred_fallthru
      _
    %89 = vsyncpa [#allocation3], 1
    %90 = vsyncpa [#allocation6], 1
    %91 = vsyncpa [#allocation4], 1
    %92 = vsyncpa [#allocation9], 1

</llo_original>
